<compile_context>
chip_gen: v7x
topology: tpu7x:2x2x1
jax: 0.10.0
libtpu: 0.0.40
codegen_flags: <defaults>
</compile_context>

<pallas_src>
import functools

import jax
import jax.numpy as jnp
from jax.experimental import pallas as pl
from jax.experimental.pallas import tpu as pltpu


def _toeplitz_weights(w, W, C):
    """(3, 3, Cin, Cout) conv weight -> (3, W*C, W*C) block-Toeplitz matrices.

    T[dy, j*C + ci, w*C + co] = w[dy, j - w + 1, ci, co]   (0 if tap out of range)

    so that   out[h, w, co] = sum_dy  x_hpad[h+dy].flatten() @ T[dy]
    reproduces a SAME 3x3 conv, with the zero padding along W baked into T.
    """
    j = jnp.arange(W)[:, None]
    wc = jnp.arange(W)[None, :]
    dx = j - wc + 1                                    # (W, W) kw tap index
    valid = (dx >= 0) & (dx <= 2)
    blocks = w[:, jnp.clip(dx, 0, 2)]                  # (3, W, W, Cin, Cout)
    blocks = jnp.where(valid[None, :, :, None, None], blocks, 0.0)
    # axes -> (dy, j, ci, w, co); merge (j, ci) and (w, co)
    return blocks.transpose(0, 1, 3, 2, 4).reshape(3, W * C, W * C)


def _resblock_kernel(x_ref, w1_ref, b1_ref, w2_ref, b2_ref, o_ref,
                     xbuf, mid, *, res_scale, nb, h):
    """One grid step == nb batch elements, fully fused ResBlock.

    x_ref : (nb, H, W*C)        lane-dense input slab
    w*_ref: (3, W*C, W*C)       block-Toeplitz conv weights (per kh tap)
    b*_ref: (1, W*C)            bias tiled to the flattened lane layout (f32)
    o_ref : (nb, H, W*C)        output slab (compute dtype)
    xbuf  : (nb*(H+1)+1, W*C)   VMEM: stacked input, shared zero halo rows
    mid   : (nb*(H+1)+1, W*C)   VMEM: conv1 activation, shared zero halo rows
    """
    WC = x_ref.shape[-1]
    S = h + 1                       # per-image stride inside the halo'd scratch
    M = nb * S - 1                  # matmul M dim (valid + nb-1 boundary rows)
    f32 = jnp.float32
    zrow = jnp.zeros((1, WC), xbuf.dtype)

    # Stage the input with shared zero halo rows.  Halos are re-zeroed every
    # step so the kernel is correct when the batch axis runs on multiple TCs.
    xbuf[0:1, :] = zrow
    mid[0:1, :] = zrow
    for i in range(nb):
        base = 1 + i * S
        xbuf[base:base + h, :] = x_ref[i].astype(xbuf.dtype)
        xbuf[base + h:base + h + 1, :] = zrow      # shared / bottom halo
        mid[base + h:base + h + 1, :] = zrow

    def conv3x3(buf, w_ref):
        # buf row r+1 holds the conv-input row whose output lands at acc row r.
        acc = jnp.dot(buf[0:M, :], w_ref[0], preferred_element_type=f32)
        acc += jnp.dot(buf[1:1 + M, :], w_ref[1], preferred_element_type=f32)
        acc += jnp.dot(buf[2:2 + M, :], w_ref[2], preferred_element_type=f32)
        return acc

    # conv1 + bias + ReLU (f32 tail).  Rows S-1, 2S-1, ... mix adjacent images
    # across the shared halo; they are never stored to o_ref and never reach a
    # valid output row through conv2 (the mid halo rows stay zero), so they
    # are left as harmless garbage instead of being masked.
    act = jnp.maximum(conv3x3(xbuf, w1_ref) + b1_ref[...], 0.0)
    act_c = act.astype(mid.dtype)

    # conv1 -> conv2 handoff: only the +/-1-row taps need the halo'd scratch;
    # the halo rows of `mid` were already zeroed above and are not overwritten.
    for i in range(nb):
        base = 1 + i * S
        mid[base:base + h, :] = act_c[i * S:i * S + h]

    # conv2 + bias: center tap fed straight from the live activation value.
    res = jnp.dot(act_c, w2_ref[1], preferred_element_type=f32)
    res += jnp.dot(mid[0:M, :], w2_ref[0], preferred_element_type=f32)
    res += jnp.dot(mid[2:2 + M, :], w2_ref[2], preferred_element_type=f32)
    res += b2_ref[...]
    if res_scale != 1.0:
        res = res * f32(res_scale)

    # Residual straight from the VMEM-resident input block; lane-dense stores.
    # (On the bf16 path the residual source is bf16-quantized x; keep x in f32
    #  if output fidelity matters more than the halved HBM traffic.)
    for i in range(nb):
        out_i = res[i * S:i * S + h] + x_ref[i].astype(f32)
        o_ref[i, :, :] = out_i.astype(o_ref.dtype)


def resblock_pallas_nhwc(x_nhwc, w1, b1, w2, b2, res_scale=1.0,
                         compute_dtype=jnp.float32, images_per_step=None,
                         vmem_limit_bytes=48 * 1024 * 1024):
    """Main (layout-native) entry point.  x_nhwc: (N, H, W, C).
    w*: (3, 3, Cin, Cout) HWIO.  b*: (Cout,).  Output: (N, H, W, C) in
    compute_dtype."""
    N, H, W, C = x_nhwc.shape
    WC = W * C
    nb = N if images_per_step is None else images_per_step
    assert N % nb == 0, "batch must be divisible by images_per_step"
    R = nb * (H + 1) + 1            # stacked scratch rows incl. shared halos

    x = x_nhwc.reshape(N, H, WC).astype(compute_dtype)
    w1_t = _toeplitz_weights(w1, W, C).astype(compute_dtype)
    w2_t = _toeplitz_weights(w2, W, C).astype(compute_dtype)
    b1_f = jnp.tile(b1.astype(jnp.float32), W).reshape(1, WC)
    b2_f = jnp.tile(b2.astype(jnp.float32), W).reshape(1, WC)

    kernel = functools.partial(_resblock_kernel, res_scale=float(res_scale),
                               nb=nb, h=H)

    out = pl.pallas_call(
        kernel,
        out_shape=jax.ShapeDtypeStruct((N, H, WC), compute_dtype),
        grid_spec=pltpu.PrefetchScalarGridSpec(
            num_scalar_prefetch=0,
            grid=(N // nb,),
            in_specs=[
                pl.BlockSpec((nb, H, WC), lambda n: (n, 0, 0)),   # x
                pl.BlockSpec((3, WC, WC), lambda n: (0, 0, 0)),   # w1 (Toeplitz)
                pl.BlockSpec((1, WC), lambda n: (0, 0)),          # b1
                pl.BlockSpec((3, WC, WC), lambda n: (0, 0, 0)),   # w2 (Toeplitz)
                pl.BlockSpec((1, WC), lambda n: (0, 0)),          # b2
            ],
            out_specs=pl.BlockSpec((nb, H, WC), lambda n: (n, 0, 0)),
            scratch_shapes=[
                pltpu.VMEM((R, WC), compute_dtype),   # staged x + shared halos
                pltpu.VMEM((R, WC), compute_dtype),   # conv1 act + shared halos
            ],
        ),
        compiler_params=pltpu.CompilerParams(
            # batch blocks are embarrassingly parallel -> shard across TCs.
            dimension_semantics=("parallel",),
            # headroom over the 16/32 MiB scoped default; kept <= ~56 MiB so
            # the same setting is safe under v7x's 64 MiB physical VMEM.
            vmem_limit_bytes=vmem_limit_bytes,
        ),
    )(x, w1_t, b1_f, w2_t, b2_f)

    return out.reshape(N, H, W, C)


def resblock_pallas(x_nchw, w1, b1, w2, b2, res_scale=1.0,
                    compute_dtype=jnp.float32, images_per_step=None,
                    vmem_limit_bytes=48 * 1024 * 1024):
    """PyTorch-layout (NCHW) convenience wrapper.

    TODO(synk): if the surrounding model can carry NHWC end-to-end, call
    resblock_pallas_nhwc directly and drop these transposes (each one is a
    standalone HBM round trip comparable to the kernel's own traffic).
    """
    x_nhwc = jnp.transpose(x_nchw, (0, 2, 3, 1))
    out = resblock_pallas_nhwc(x_nhwc, w1, b1, w2, b2, res_scale=res_scale,
                               compute_dtype=compute_dtype,
                               images_per_step=images_per_step,
                               vmem_limit_bytes=vmem_limit_bytes)
    return jnp.transpose(out, (0, 3, 1, 2)).astype(x_nchw.dtype)


def _reference(x_nchw, w1, b1, w2, b2, res_scale=1.0):
    """Pure-JAX reference (lax conv) for validation."""
    x = jnp.transpose(x_nchw, (0, 2, 3, 1))
    dn = ("NHWC", "HWIO", "NHWC")
    y = jax.lax.conv_general_dilated(x, w1, (1, 1), "SAME",
                                     dimension_numbers=dn) + b1
    y = jnp.maximum(y, 0.0)
    y = jax.lax.conv_general_dilated(y, w2, (1, 1), "SAME",
                                     dimension_numbers=dn) + b2
    out = y * res_scale + x
    return jnp.transpose(out, (0, 3, 1, 2))


if __name__ == "__main__":
    # Small, module-consistent shapes: N=2, n_feats=8, 16x16 spatial
    # (W*C = 128 -> exactly one lane-dense vreg row; whole batch per grid step).
    N, C, H, W = 2, 8, 16, 16
    key = jax.random.PRNGKey(0)
    kx, kw1, kb1, kw2, kb2 = jax.random.split(key, 5)

    x = jax.random.normal(kx, (N, C, H, W), jnp.float32)
    fan_in = C * 3 * 3
    w1 = jax.random.normal(kw1, (3, 3, C, C), jnp.float32) / jnp.sqrt(fan_in)
    b1 = jax.random.normal(kb1, (C,), jnp.float32) * 0.01
    w2 = jax.random.normal(kw2, (3, 3, C, C), jnp.float32) / jnp.sqrt(fan_in)
    b2 = jax.random.normal(kb2, (C,), jnp.float32) * 0.01

    ref = _reference(x, w1, b1, w2, b2, res_scale=1.0)

    # f32 path (all generations)
    out = jax.block_until_ready(resblock_pallas(x, w1, b1, w2, b2, res_scale=1.0))
    assert out.shape == (N, C, H, W)
    err = float(jnp.max(jnp.abs(out - ref)))
    assert err < 2e-4, err

    # bf16 compute path (v5e/v6e/v7x MXU bf16 rate; halves input AND output
    # HBM/VMEM traffic).  f32 accumulation and f32 bias/ReLU/residual tail;
    # loose tolerance because x, weights and the stored output are bf16.
    out_bf16 = jax.block_until_ready(
        resblock_pallas(x, w1, b1, w2, b2, res_scale=1.0,
                        compute_dtype=jnp.bfloat16))
    err_bf16 = float(jnp.max(jnp.abs(out_bf16 - ref)))
    assert err_bf16 < 3e-1, err_bf16

    print("KERNEL_OK")
</pallas_src>

<mosaic_0001>
module attributes {stable_mosaic.version = 11 : i64} {
  func.func @_resblock_kernel(%arg0: i32, %arg1: memref<2x16x128xf32, #tpu.memory_space<vmem>>, %arg2: memref<3x128x128xf32, #tpu.memory_space<vmem>>, %arg3: memref<1x128xf32, #tpu.memory_space<vmem>>, %arg4: memref<3x128x128xf32, #tpu.memory_space<vmem>>, %arg5: memref<1x128xf32, #tpu.memory_space<vmem>>, %arg6: memref<2x16x128xf32, #tpu.memory_space<vmem>>, %arg7: memref<35x128xf32, #tpu.memory_space<vmem>>, %arg8: memref<35x128xf32, #tpu.memory_space<vmem>>) attributes {dimension_semantics = [#tpu.dimension_semantics<parallel>], iteration_bounds = array<i64: 1>, scalar_prefetch = 0 : i64, scratch_operands = 2 : i64, tpu.core_type = #tpu.core_type<tc>, window_params = [{transform_indices = @transform_0, window_bounds = array<i64: 2, 16, 128>}, {pipeline_mode = #tpu.pipeline_mode<synchronous>, transform_indices = @transform_1, window_bounds = array<i64: 3, 128, 128>}, {pipeline_mode = #tpu.pipeline_mode<synchronous>, transform_indices = @transform_2, window_bounds = array<i64: 1, 128>}, {pipeline_mode = #tpu.pipeline_mode<synchronous>, transform_indices = @transform_3, window_bounds = array<i64: 3, 128, 128>}, {pipeline_mode = #tpu.pipeline_mode<synchronous>, transform_indices = @transform_4, window_bounds = array<i64: 1, 128>}, {transform_indices = @transform_5, window_bounds = array<i64: 2, 16, 128>}]} {
    %cst = arith.constant 0.000000e+00 : f32
    %0 = vector.broadcast %cst : f32 to vector<1x128xf32>
    %c0 = arith.constant 0 : index
    %c0_0 = arith.constant 0 : index
    %1 = vector.load %arg7[%c0, %c0_0] : memref<35x128xf32, #tpu.memory_space<vmem>>, vector<1x128xf32>
    tpu.vector_store %arg7[%c0, %c0_0], %0 {strides = array<i32>} : memref<35x128xf32, #tpu.memory_space<vmem>>, vector<1x128xf32>,
    %c0_1 = arith.constant 0 : index
    %c0_2 = arith.constant 0 : index
    %2 = vector.load %arg8[%c0_1, %c0_2] : memref<35x128xf32, #tpu.memory_space<vmem>>, vector<1x128xf32>
    tpu.vector_store %arg8[%c0_1, %c0_2], %0 {strides = array<i32>} : memref<35x128xf32, #tpu.memory_space<vmem>>, vector<1x128xf32>,
    %c0_3 = arith.constant 0 : index
    %c0_4 = arith.constant 0 : index
    %c0_5 = arith.constant 0 : index
    %3 = vector.load %arg1[%c0_3, %c0_4, %c0_5] : memref<2x16x128xf32, #tpu.memory_space<vmem>>, vector<1x16x128xf32>
    %4 = vector.shape_cast %3 : vector<1x16x128xf32> to vector<16x128xf32>
    %c1 = arith.constant 1 : index
    %c0_6 = arith.constant 0 : index
    %5 = vector.load %arg7[%c1, %c0_6] : memref<35x128xf32, #tpu.memory_space<vmem>>, vector<16x128xf32>
    tpu.vector_store %arg7[%c1, %c0_6], %4 {strides = array<i32>} : memref<35x128xf32, #tpu.memory_space<vmem>>, vector<16x128xf32>,
    %c17 = arith.constant 17 : index
    %c0_7 = arith.constant 0 : index
    %6 = vector.load %arg7[%c17, %c0_7] : memref<35x128xf32, #tpu.memory_space<vmem>>, vector<1x128xf32>
    tpu.vector_store %arg7[%c17, %c0_7], %0 {strides = array<i32>} : memref<35x128xf32, #tpu.memory_space<vmem>>, vector<1x128xf32>,
    %c17_8 = arith.constant 17 : index
    %c0_9 = arith.constant 0 : index
    %7 = vector.load %arg8[%c17_8, %c0_9] : memref<35x128xf32, #tpu.memory_space<vmem>>, vector<1x128xf32>
    tpu.vector_store %arg8[%c17_8, %c0_9], %0 {strides = array<i32>} : memref<35x128xf32, #tpu.memory_space<vmem>>, vector<1x128xf32>,
    %c1_10 = arith.constant 1 : index
    %c0_11 = arith.constant 0 : index
    %c0_12 = arith.constant 0 : index
    %8 = vector.load %arg1[%c1_10, %c0_11, %c0_12] : memref<2x16x128xf32, #tpu.memory_space<vmem>>, vector<1x16x128xf32>
    %9 = vector.shape_cast %8 : vector<1x16x128xf32> to vector<16x128xf32>
    %c18 = arith.constant 18 : index
    %c0_13 = arith.constant 0 : index
    %10 = vector.load %arg7[%c18, %c0_13] : memref<35x128xf32, #tpu.memory_space<vmem>>, vector<16x128xf32>
    tpu.vector_store %arg7[%c18, %c0_13], %9 {strides = array<i32>} : memref<35x128xf32, #tpu.memory_space<vmem>>, vector<16x128xf32>,
    %c34 = arith.constant 34 : index
    %c0_14 = arith.constant 0 : index
    %11 = vector.load %arg7[%c34, %c0_14] : memref<35x128xf32, #tpu.memory_space<vmem>>, vector<1x128xf32>
    tpu.vector_store %arg7[%c34, %c0_14], %0 {strides = array<i32>} : memref<35x128xf32, #tpu.memory_space<vmem>>, vector<1x128xf32>,
    %c34_15 = arith.constant 34 : index
    %c0_16 = arith.constant 0 : index
    %12 = vector.load %arg8[%c34_15, %c0_16] : memref<35x128xf32, #tpu.memory_space<vmem>>, vector<1x128xf32>
    tpu.vector_store %arg8[%c34_15, %c0_16], %0 {strides = array<i32>} : memref<35x128xf32, #tpu.memory_space<vmem>>, vector<1x128xf32>,
    %c0_17 = arith.constant 0 : index
    %c0_18 = arith.constant 0 : index
    %13 = vector.load %arg7[%c0_17, %c0_18] : memref<35x128xf32, #tpu.memory_space<vmem>>, vector<33x128xf32>
    %c0_19 = arith.constant 0 : index
    %c0_20 = arith.constant 0 : index
    %c0_21 = arith.constant 0 : index
    %14 = vector.load %arg2[%c0_19, %c0_20, %c0_21] : memref<3x128x128xf32, #tpu.memory_space<vmem>>, vector<1x128x128xf32>
    %15 = vector.shape_cast %14 : vector<1x128x128xf32> to vector<128x128xf32>
    %cst_22 = arith.constant dense<0.000000e+00> : vector<33x128xf32>
    %16 = tpu.matmul %13, %15, %cst_22 {dimension_numbers = #tpu.dot_dimension_numbers<[1], [0], [0], [1], [0, 0, 1, 1], [], []>} : vector<33x128xf32>, vector<128x128xf32>, vector<33x128xf32> -> vector<33x128xf32>
    %c1_23 = arith.constant 1 : index
    %c0_24 = arith.constant 0 : index
    %17 = vector.load %arg7[%c1_23, %c0_24] : memref<35x128xf32, #tpu.memory_space<vmem>>, vector<33x128xf32>
    %c1_25 = arith.constant 1 : index
    %c0_26 = arith.constant 0 : index
    %c0_27 = arith.constant 0 : index
    %18 = vector.load %arg2[%c1_25, %c0_26, %c0_27] : memref<3x128x128xf32, #tpu.memory_space<vmem>>, vector<1x128x128xf32>
    %19 = vector.shape_cast %18 : vector<1x128x128xf32> to vector<128x128xf32>
    %cst_28 = arith.constant dense<0.000000e+00> : vector<33x128xf32>
    %20 = tpu.matmul %17, %19, %cst_28 {dimension_numbers = #tpu.dot_dimension_numbers<[1], [0], [0], [1], [0, 0, 1, 1], [], []>} : vector<33x128xf32>, vector<128x128xf32>, vector<33x128xf32> -> vector<33x128xf32>
    %21 = arith.addf %16, %20 : vector<33x128xf32>
    %c2 = arith.constant 2 : index
    %c0_29 = arith.constant 0 : index
    %22 = vector.load %arg7[%c2, %c0_29] : memref<35x128xf32, #tpu.memory_space<vmem>>, vector<33x128xf32>
    %c2_30 = arith.constant 2 : index
    %c0_31 = arith.constant 0 : index
    %c0_32 = arith.constant 0 : index
    %23 = vector.load %arg2[%c2_30, %c0_31, %c0_32] : memref<3x128x128xf32, #tpu.memory_space<vmem>>, vector<1x128x128xf32>
    %24 = vector.shape_cast %23 : vector<1x128x128xf32> to vector<128x128xf32>
    %cst_33 = arith.constant dense<0.000000e+00> : vector<33x128xf32>
    %25 = tpu.matmul %22, %24, %cst_33 {dimension_numbers = #tpu.dot_dimension_numbers<[1], [0], [0], [1], [0, 0, 1, 1], [], []>} : vector<33x128xf32>, vector<128x128xf32>, vector<33x128xf32> -> vector<33x128xf32>
    %26 = arith.addf %21, %25 : vector<33x128xf32>
    %c0_34 = arith.constant 0 : index
    %c0_35 = arith.constant 0 : index
    %27 = vector.load %arg3[%c0_34, %c0_35] : memref<1x128xf32, #tpu.memory_space<vmem>>, vector<1x128xf32>
    %28 = vector.broadcast %27 : vector<1x128xf32> to vector<33x128xf32>
    %29 = arith.addf %26, %28 : vector<33x128xf32>
    %cst_36 = arith.constant 0.000000e+00 : f32
    %30 = vector.broadcast %cst_36 : f32 to vector<33x128xf32>
    %31 = arith.maximumf %29, %30 : vector<33x128xf32>
    %32 = vector.extract_strided_slice %31 {offsets = [0, 0], sizes = [16, 128], strides = [1, 1]} : vector<33x128xf32> to vector<16x128xf32>
    %c1_37 = arith.constant 1 : index
    %c0_38 = arith.constant 0 : index
    %33 = vector.load %arg8[%c1_37, %c0_38] : memref<35x128xf32, #tpu.memory_space<vmem>>, vector<16x128xf32>
    tpu.vector_store %arg8[%c1_37, %c0_38], %32 {strides = array<i32>} : memref<35x128xf32, #tpu.memory_space<vmem>>, vector<16x128xf32>,
    %34 = vector.extract_strided_slice %31 {offsets = [17, 0], sizes = [16, 128], strides = [1, 1]} : vector<33x128xf32> to vector<16x128xf32>
    %c18_39 = arith.constant 18 : index
    %c0_40 = arith.constant 0 : index
    %35 = vector.load %arg8[%c18_39, %c0_40] : memref<35x128xf32, #tpu.memory_space<vmem>>, vector<16x128xf32>
    tpu.vector_store %arg8[%c18_39, %c0_40], %34 {strides = array<i32>} : memref<35x128xf32, #tpu.memory_space<vmem>>, vector<16x128xf32>,
    %c1_41 = arith.constant 1 : index
    %c0_42 = arith.constant 0 : index
    %c0_43 = arith.constant 0 : index
    %36 = vector.load %arg4[%c1_41, %c0_42, %c0_43] : memref<3x128x128xf32, #tpu.memory_space<vmem>>, vector<1x128x128xf32>
    %37 = vector.shape_cast %36 : vector<1x128x128xf32> to vector<128x128xf32>
    %cst_44 = arith.constant dense<0.000000e+00> : vector<33x128xf32>
    %38 = tpu.matmul %31, %37, %cst_44 {dimension_numbers = #tpu.dot_dimension_numbers<[1], [0], [0], [1], [0, 0, 1, 1], [], []>} : vector<33x128xf32>, vector<128x128xf32>, vector<33x128xf32> -> vector<33x128xf32>
    %c0_45 = arith.constant 0 : index
    %c0_46 = arith.constant 0 : index
    %39 = vector.load %arg8[%c0_45, %c0_46] : memref<35x128xf32, #tpu.memory_space<vmem>>, vector<33x128xf32>
    %c0_47 = arith.constant 0 : index
    %c0_48 = arith.constant 0 : index
    %c0_49 = arith.constant 0 : index
    %40 = vector.load %arg4[%c0_47, %c0_48, %c0_49] : memref<3x128x128xf32, #tpu.memory_space<vmem>>, vector<1x128x128xf32>
    %41 = vector.shape_cast %40 : vector<1x128x128xf32> to vector<128x128xf32>
    %cst_50 = arith.constant dense<0.000000e+00> : vector<33x128xf32>
    %42 = tpu.matmul %39, %41, %cst_50 {dimension_numbers = #tpu.dot_dimension_numbers<[1], [0], [0], [1], [0, 0, 1, 1], [], []>} : vector<33x128xf32>, vector<128x128xf32>, vector<33x128xf32> -> vector<33x128xf32>
    %43 = arith.addf %38, %42 : vector<33x128xf32>
    %c2_51 = arith.constant 2 : index
    %c0_52 = arith.constant 0 : index
    %44 = vector.load %arg8[%c2_51, %c0_52] : memref<35x128xf32, #tpu.memory_space<vmem>>, vector<33x128xf32>
    %c2_53 = arith.constant 2 : index
    %c0_54 = arith.constant 0 : index
    %c0_55 = arith.constant 0 : index
    %45 = vector.load %arg4[%c2_53, %c0_54, %c0_55] : memref<3x128x128xf32, #tpu.memory_space<vmem>>, vector<1x128x128xf32>
    %46 = vector.shape_cast %45 : vector<1x128x128xf32> to vector<128x128xf32>
    %cst_56 = arith.constant dense<0.000000e+00> : vector<33x128xf32>
    %47 = tpu.matmul %44, %46, %cst_56 {dimension_numbers = #tpu.dot_dimension_numbers<[1], [0], [0], [1], [0, 0, 1, 1], [], []>} : vector<33x128xf32>, vector<128x128xf32>, vector<33x128xf32> -> vector<33x128xf32>
    %48 = arith.addf %43, %47 : vector<33x128xf32>
    %c0_57 = arith.constant 0 : index
    %c0_58 = arith.constant 0 : index
    %49 = vector.load %arg5[%c0_57, %c0_58] : memref<1x128xf32, #tpu.memory_space<vmem>>, vector<1x128xf32>
    %50 = vector.broadcast %49 : vector<1x128xf32> to vector<33x128xf32>
    %51 = arith.addf %48, %50 : vector<33x128xf32>
    %52 = vector.extract_strided_slice %51 {offsets = [0, 0], sizes = [16, 128], strides = [1, 1]} : vector<33x128xf32> to vector<16x128xf32>
    %c0_59 = arith.constant 0 : index
    %c0_60 = arith.constant 0 : index
    %c0_61 = arith.constant 0 : index
    %53 = vector.load %arg1[%c0_59, %c0_60, %c0_61] : memref<2x16x128xf32, #tpu.memory_space<vmem>>, vector<1x16x128xf32>
    %54 = vector.shape_cast %53 : vector<1x16x128xf32> to vector<16x128xf32>
    %55 = arith.addf %52, %54 : vector<16x128xf32>
    %c0_62 = arith.constant 0 : index
    %c0_63 = arith.constant 0 : index
    %c0_64 = arith.constant 0 : index
    %56 = vector.load %arg6[%c0_62, %c0_63, %c0_64] : memref<2x16x128xf32, #tpu.memory_space<vmem>>, vector<1x16x128xf32>
    %57 = vector.shape_cast %56 : vector<1x16x128xf32> to vector<16x128xf32>
    %58 = vector.shape_cast %55 : vector<16x128xf32> to vector<1x16x128xf32>
    tpu.vector_store %arg6[%c0_62, %c0_63, %c0_64], %58 {strides = array<i32>} : memref<2x16x128xf32, #tpu.memory_space<vmem>>, vector<1x16x128xf32>,
    %59 = vector.extract_strided_slice %51 {offsets = [17, 0], sizes = [16, 128], strides = [1, 1]} : vector<33x128xf32> to vector<16x128xf32>
    %c1_65 = arith.constant 1 : index
    %c0_66 = arith.constant 0 : index
    %c0_67 = arith.constant 0 : index
    %60 = vector.load %arg1[%c1_65, %c0_66, %c0_67] : memref<2x16x128xf32, #tpu.memory_space<vmem>>, vector<1x16x128xf32>
    %61 = vector.shape_cast %60 : vector<1x16x128xf32> to vector<16x128xf32>
    %62 = arith.addf %59, %61 : vector<16x128xf32>
    %c1_68 = arith.constant 1 : index
    %c0_69 = arith.constant 0 : index
    %c0_70 = arith.constant 0 : index
    %63 = vector.load %arg6[%c1_68, %c0_69, %c0_70] : memref<2x16x128xf32, #tpu.memory_space<vmem>>, vector<1x16x128xf32>
    %64 = vector.shape_cast %63 : vector<1x16x128xf32> to vector<16x128xf32>
    %65 = vector.shape_cast %62 : vector<16x128xf32> to vector<1x16x128xf32>
    tpu.vector_store %arg6[%c1_68, %c0_69, %c0_70], %65 {strides = array<i32>} : memref<2x16x128xf32, #tpu.memory_space<vmem>>, vector<1x16x128xf32>,
    return
  }
  func.func @transform_0(%arg0: i32) -> (i32, i32, i32) {
    %c0_i32 = arith.constant 0 : i32
    %c0_i32_0 = arith.constant 0 : i32
    %c0_i32_1 = arith.constant 0 : i32
    return %arg0, %c0_i32, %c0_i32_0 : i32, i32, i32
  }
  func.func @transform_1(%arg0: i32) -> (i32, i32, i32) {
    %c0_i32 = arith.constant 0 : i32
    %c0_i32_0 = arith.constant 0 : i32
    %c0_i32_1 = arith.constant 0 : i32
    %c0_i32_2 = arith.constant 0 : i32
    return %c0_i32, %c0_i32_0, %c0_i32_1 : i32, i32, i32
  }
  func.func @transform_2(%arg0: i32) -> (i32, i32) {
    %c0_i32 = arith.constant 0 : i32
    %c0_i32_0 = arith.constant 0 : i32
    %c0_i32_1 = arith.constant 0 : i32
    return %c0_i32, %c0_i32_0 : i32, i32
  }
  func.func @transform_3(%arg0: i32) -> (i32, i32, i32) {
    %c0_i32 = arith.constant 0 : i32
    %c0_i32_0 = arith.constant 0 : i32
    %c0_i32_1 = arith.constant 0 : i32
    %c0_i32_2 = arith.constant 0 : i32
    return %c0_i32, %c0_i32_0, %c0_i32_1 : i32, i32, i32
  }
  func.func @transform_4(%arg0: i32) -> (i32, i32) {
    %c0_i32 = arith.constant 0 : i32
    %c0_i32_0 = arith.constant 0 : i32
    %c0_i32_1 = arith.constant 0 : i32
    return %c0_i32, %c0_i32_0 : i32, i32
  }
  func.func @transform_5(%arg0: i32) -> (i32, i32, i32) {
    %c0_i32 = arith.constant 0 : i32
    %c0_i32_0 = arith.constant 0 : i32
    %c0_i32_1 = arith.constant 0 : i32
    return %arg0, %c0_i32, %c0_i32_0 : i32, i32, i32
  }
}

</mosaic_0001>

<llo_original>
// kernel: tpu_custom_call.1
$region0: #{tpu_custom_call.1}
  #allocation0 [shape = 'u32[]', space=smem, size = 0x4, offset = 0x4, fixed_abs, tag = 'smem constant byte address 0x4 - core index']
  #allocation1 [shape = 'u32[144,128]{1,0:T(1,128)}', space=vmem, size = 0x12000, scoped, tag = 'internal scratch']
  #allocation2 [shape = 'f32[35,128]{1,0:T(8,128)}', space=vmem, size = 0x5000, scoped, tag = 'scratch operand']
  #allocation3 [shape = 'f32[35,128]{1,0:T(8,128)}', space=vmem, size = 0x5000, scoped, tag = 'scratch operand']
  %s0 = inlined_call_operand.hbm [shape: f32[2,16,128], index: 0, kind: input, shape index: {}]
  %s1 = inlined_call_operand.hbm [shape: f32[3,128,128], index: 1, kind: input, shape index: {}]
  %s2 = inlined_call_operand.vmem [shape: f32[1,128], index: 2, kind: input, shape index: {}]
  %s3 = inlined_call_operand.hbm [shape: f32[3,128,128], index: 3, kind: input, shape index: {}]
  %s4 = inlined_call_operand.vmem [shape: f32[1,128], index: 4, kind: input, shape index: {}]
  %s5 = inlined_call_operand.hbm [shape: f32[2,16,128], index: 5, kind: output, shape index: {}]
  %s6 = sld [smem:[#allocation0]]
  $region42: #{tpu_custom_call.1} parent=0
    _
  %s8 = ssub.s32 1, %s6
  %s9 = scalar_select 0, %s8, %s6
  $region1: #{tpu_custom_call.1} parent=0
    #allocation4 [shape = 'u8[16384]{0}', space=vmem, size = 0x4000, scoped, tag = 'input window, operand 0, single buffered']
    #allocation5 [shape = 's32[1]{0}', space=sflag, size = 0x4, scoped, tag = 'scoped memory for tpu_custom_call.1']
    #allocation6 [shape = 's32[1]{0}', space=sflag, size = 0x4, scoped, tag = 'scoped memory for tpu_custom_call.1']
    #allocation7 [shape = 'u8[196608]{0}', space=vmem, size = 0x30000, scoped, tag = 'input window, operand 1, single buffered']
    #allocation8 [shape = 's32[1]{0}', space=sflag, size = 0x4, scoped, tag = 'scoped memory for tpu_custom_call.1']
    #allocation9 [shape = 'u8[196608]{0}', space=vmem, size = 0x30000, scoped, tag = 'input window, operand 3, single buffered']
    #allocation10 [shape = 'u8[16384]{0}', space=vmem, size = 0x4000, scoped, tag = 'output window, operand 0, single buffered']
    %10 = vsyncpa [#allocation5], 0
    %11 = vsyncpa [#allocation8], 0
    %12 = vsyncpa [#allocation6], 0
    // Predicated region
    $region2: #{tpu_custom_call.1} parent=1 // pred_check
      _
    $region3: #{tpu_custom_call.1} parent=1 // pred_check_branch
      %14 = sbr.rel (0) target = $region5
    $region4: #{tpu_custom_call.1} parent=1 // pred_region
      %s16 = ssub.s32 512, 512
      %17 = vsyncadd [#allocation5], %s16
      %s18 = sshll.u32 [#allocation4], 4
      %s19 = int_to_ptr.vmem [resolvable:$true] %s18
      %24 = dma.hbm_to_vmem [thread:$0]  %s0, 512, %s19, [#allocation5], 128, 128, 8
    $region5: #{tpu_custom_call.1} parent=1 // pred_fallthru
      _
    // Predicated region
    $region6: #{tpu_custom_call.1} parent=1 // pred_check
      _
    $region7: #{tpu_custom_call.1} parent=1 // pred_check_branch
      %26 = sbr.rel (0) target = $region9
    $region8: #{tpu_custom_call.1} parent=1 // pred_region
      %s28 = ssub.s32 6144, 6144
      %29 = vsyncadd [#allocation8], %s28
      %s30 = sshll.u32 [#allocation7], 4
      %s31 = int_to_ptr.vmem [resolvable:$true] %s30
      %36 = dma.hbm_to_vmem [thread:$0]  %s1, 6144, %s31, [#allocation8], 128, 128, 8
    $region9: #{tpu_custom_call.1} parent=1 // pred_fallthru
      _
    // Predicated region
    $region10: #{tpu_custom_call.1} parent=1 // pred_check
      _
    $region11: #{tpu_custom_call.1} parent=1 // pred_check_branch
      %38 = sbr.rel (0) target = $region13
    $region12: #{tpu_custom_call.1} parent=1 // pred_region
      _
    $region13: #{tpu_custom_call.1} parent=1 // pred_fallthru
      _
    // Predicated region
    $region14: #{tpu_custom_call.1} parent=1 // pred_check
      _
    $region15: #{tpu_custom_call.1} parent=1 // pred_check_branch
      %40 = sbr.rel (0) target = $region17
    $region16: #{tpu_custom_call.1} parent=1 // pred_region
      %s42 = ssub.s32 6144, 6144
      %43 = vsyncadd [#allocation8], %s42
      %s44 = sshll.u32 [#allocation9], 4
      %s45 = int_to_ptr.vmem [resolvable:$true] %s44
      %50 = dma.hbm_to_vmem [thread:$0]  %s3, 6144, %s45, [#allocation8], 128, 128, 8
    $region17: #{tpu_custom_call.1} parent=1 // pred_fallthru
      _
    // Predicated region
    $region18: #{tpu_custom_call.1} parent=1 // pred_check
      _
    $region19: #{tpu_custom_call.1} parent=1 // pred_check_branch
      %52 = sbr.rel (0) target = $region21
    $region20: #{tpu_custom_call.1} parent=1 // pred_region
      _
    $region21: #{tpu_custom_call.1} parent=1 // pred_fallthru
      _
    // Predicated region
    $region22: #{tpu_custom_call.1} parent=1 // pred_check
      _
    $region23: #{tpu_custom_call.1} parent=1 // pred_check_branch
      %54 = sbr.rel (0) target = $region25
    $region24: #{tpu_custom_call.1} parent=1 // pred_region
      %55 = dma.done [#allocation5], 512
    $region25: #{tpu_custom_call.1} parent=1 // pred_fallthru
      _
    // Predicated region
    $region26: #{tpu_custom_call.1} parent=1 // pred_check
      _
    $region27: #{tpu_custom_call.1} parent=1 // pred_check_branch
      %57 = sbr.rel (0) target = $region29
    $region28: #{tpu_custom_call.1} parent=1 // pred_region
      %58 = dma.done [#allocation8], 6144
    $region29: #{tpu_custom_call.1} parent=1 // pred_fallthru
      _
    // Predicated region
    $region30: #{tpu_custom_call.1} parent=1 // pred_check
      _
    $region31: #{tpu_custom_call.1} parent=1 // pred_check_branch
      %60 = sbr.rel (0) target = $region33
    $region32: #{tpu_custom_call.1} parent=1 // pred_region
      %61 = dma.done [#allocation8], 6144
    $region33: #{tpu_custom_call.1} parent=1 // pred_fallthru
      _
    %62 = vst [vmem:[#allocation2] sm:$0x1] 0.0
    %63 = vst [vmem:[#allocation3] sm:$0x1] 0.0
    %v64 = vld [vmem:[#allocation4] sm:$0xff]
    %v65 = vld [vmem:[#allocation4 + $0x8] sm:$0xff]
    %66 = vst [vmem:[#allocation2 + $0x1] sm:$0xff] %v64
    %67 = vst [vmem:[#allocation2 + $0x9] sm:$0xff] %v65
    %68 = vst [vmem:[#allocation2 + $0x11] sm:$0x1] 0.0
    %69 = vst [vmem:[#allocation3 + $0x11] sm:$0x1] 0.0
    %s70 = scalar_lea.vmem [#allocation4], 16
    %v71 = vld [vmem:[%s70] sm:$0xff]
    %v72 = vld [vmem:[%s70 + $0x8] sm:$0xff]
    %73 = vst [vmem:[#allocation2 + $0x12] sm:$0xff] %v71
    %74 = vst [vmem:[#allocation2 + $0x1a] sm:$0xff] %v72
    %75 = vst [vmem:[#allocation2 + $0x22] sm:$0x1] 0.0
    %76 = vst [vmem:[#allocation3 + $0x22] sm:$0x1] 0.0
    %v77 = vld [vmem:[#allocation2] sm:$0xff]
    %v78 = vld [vmem:[#allocation2 + $0x8] sm:$0xff]
    %v79 = vld [vmem:[#allocation2 + $0x10] sm:$0xff]
    %v80 = vld [vmem:[#allocation2 + $0x18] sm:$0xff]
    %v81 = vld [vmem:[#allocation2 + $0x20] sm:$0x1]
    %v82 = vld [vmem:[#allocation7] sm:$0xff]
    %v83 = vld [vmem:[#allocation7 + $0x8] sm:$0xff]
    %v84 = vld [vmem:[#allocation7 + $0x10] sm:$0xff]
    %v85 = vld [vmem:[#allocation7 + $0x18] sm:$0xff]
    %v86 = vld [vmem:[#allocation7 + $0x20] sm:$0xff]
    %v87 = vld [vmem:[#allocation7 + $0x28] sm:$0xff]
    %v88 = vld [vmem:[#allocation7 + $0x30] sm:$0xff]
    %v89 = vld [vmem:[#allocation7 + $0x38] sm:$0xff]
    %v90 = vld [vmem:[#allocation7 + $0x40] sm:$0xff]
    %v91 = vld [vmem:[#allocation7 + $0x48] sm:$0xff]
    %v92 = vld [vmem:[#allocation7 + $0x50] sm:$0xff]
    %v93 = vld [vmem:[#allocation7 + $0x58] sm:$0xff]
    %v94 = vld [vmem:[#allocation7 + $0x60] sm:$0xff]
    %v95 = vld [vmem:[#allocation7 + $0x68] sm:$0xff]
    %v96 = vld [vmem:[#allocation7 + $0x70] sm:$0xff]
    %v97 = vld [vmem:[#allocation7 + $0x78] sm:$0xff]
    %v98 = vld [vmem:[#allocation2 + $0x1] sm:$0xff]
    %v99 = vld [vmem:[#allocation2 + $0x9] sm:$0xff]
    %v100 = vld [vmem:[#allocation2 + $0x11] sm:$0xff]
    %v101 = vld [vmem:[#allocation2 + $0x19] sm:$0xff]
    %v102 = vld [vmem:[#allocation2 + $0x21] sm:$0x1]
    %s103 = scalar_lea.vmem [#allocation7], 128
    %v104 = vld [vmem:[%s103] sm:$0xff]
    %v105 = vld [vmem:[%s103 + $0x8] sm:$0xff]
    %v106 = vld [vmem:[%s103 + $0x10] sm:$0xff]
    %v107 = vld [vmem:[%s103 + $0x18] sm:$0xff]
    %v108 = vld [vmem:[%s103 + $0x20] sm:$0xff]
    %v109 = vld [vmem:[%s103 + $0x28] sm:$0xff]
    %v110 = vld [vmem:[%s103 + $0x30] sm:$0xff]
    %v111 = vld [vmem:[%s103 + $0x38] sm:$0xff]
    %v112 = vld [vmem:[%s103 + $0x40] sm:$0xff]
    %v113 = vld [vmem:[%s103 + $0x48] sm:$0xff]
    %v114 = vld [vmem:[%s103 + $0x50] sm:$0xff]
    %v115 = vld [vmem:[%s103 + $0x58] sm:$0xff]
    %v116 = vld [vmem:[%s103 + $0x60] sm:$0xff]
    %v117 = vld [vmem:[%s103 + $0x68] sm:$0xff]
    %v118 = vld [vmem:[%s103 + $0x70] sm:$0xff]
    %v119 = vld [vmem:[%s103 + $0x78] sm:$0xff]
    %120 = vmatprep.subr.mxu0 0.0
    %121 = vmatpush1.msra.mxu0 %v104
    %122 = vmatprep.subr.mxu0 0.0
    %123 = vmatpush1.msra.mxu0 %v105
    %124 = vmatprep.subr.mxu0 0.0
    %125 = vmatpush1.msra.mxu0 %v106
    %126 = vmatprep.subr.mxu0 0.0
    %127 = vmatpush1.msra.mxu0 %v107
    %128 = vmatprep.subr.mxu0 0.0
    %129 = vmatpush1.msra.mxu0 %v108
    %130 = vmatprep.subr.mxu0 0.0
    %131 = vmatpush1.msra.mxu0 %v109
    %132 = vmatprep.subr.mxu0 0.0
    %133 = vmatpush1.msra.mxu0 %v110
    %134 = vmatprep.subr.mxu0 0.0
    %135 = vmatpush1.msra.mxu0 %v111
    %136 = vmatprep.subr.mxu0 0.0
    %137 = vmatpush1.msra.mxu0 %v112
    %138 = vmatprep.subr.mxu0 0.0
    %139 = vmatpush1.msra.mxu0 %v113
    %140 = vmatprep.subr.mxu0 0.0
    %141 = vmatpush1.msra.mxu0 %v114
    %142 = vmatprep.subr.mxu0 0.0
    %143 = vmatpush1.msra.mxu0 %v115
    %144 = vmatprep.subr.mxu0 0.0
    %145 = vmatpush1.msra.mxu0 %v116
    %146 = vmatprep.subr.mxu0 0.0
    %147 = vmatpush1.msra.mxu0 %v117
    %148 = vmatprep.subr.mxu0 0.0
    %149 = vmatpush1.msra.mxu0 %v118
    %150 = vmatprep.subr.mxu0 0.0
    %151 = vmatpush1.msra.mxu0 %v119
    %152 = vmatprep.subr.mxu0 0.0
    %153 = vmatpush1.msra.mxu0 0.0
    %154 = vmatprep.subr.mxu0 0.0
    %155 = vmatpush1.msra.mxu0 0.0
    %156 = vmatprep.subr.mxu0 0.0
    %157 = vmatpush1.msra.mxu0 0.0
    %158 = vmatprep.subr.mxu0 0.0
    %159 = vmatpush1.msra.mxu0 0.0
    %160 = vmatprep.subr.mxu0 0.0
    %161 = vmatpush1.msra.mxu0 0.0
    %162 = vmatprep.subr.mxu0 0.0
    %163 = vmatpush1.msra.mxu0 0.0
    %164 = vmatprep.subr.mxu0 0.0
    %165 = vmatpush1.msra.mxu0 0.0
    %166 = vmatprep.subr.mxu0 0.0
    %167 = vmatpush1.msra.mxu0 0.0
    %168 = vmatprep.subr.mxu0 0.0
    %169 = vmatpush1.msra.mxu0 0.0
    %170 = vmatprep.subr.mxu0 0.0
    %171 = vmatpush1.msra.mxu0 0.0
    %172 = vmatprep.subr.mxu0 0.0
    %173 = vmatpush1.msra.mxu0 0.0
    %174 = vmatprep.subr.mxu0 0.0
    %175 = vmatpush1.msra.mxu0 0.0
    %176 = vmatprep.subr.mxu0 0.0
    %177 = vmatpush1.msra.mxu0 0.0
    %178 = vmatprep.subr.mxu0 0.0
    %179 = vmatpush1.msra.mxu0 0.0
    %180 = vmatprep.subr.mxu0 0.0
    %181 = vmatpush1.msra.mxu0 0.0
    %182 = vmatprep.subr.mxu0 0.0
    %183 = vmatpush1.msra.mxu0 0.0
    %184 = vmatprep.mubr.f32.mxu0 0.0
    %185 = vmatmul.mubr.f32.gmra.mrb[0].mxu0 %v98
    %v186 = vpop.f32.mrb[0].mxu0
    %v187 = vadd.f32 0.0, %v186
    %v188 = vpop.f32.mrb[0].mxu0
    %189 = vmatprep.mubr.f32.mxu0 0.0
    %190 = vmatmul.mubr.f32.gmra.mrb[0].mxu0 %v99
    %v191 = vpop.f32.mrb[0].mxu0
    %v192 = vadd.f32 0.0, %v191
    %v193 = vpop.f32.mrb[0].mxu0
    %194 = vmatprep.mubr.f32.mxu0 0.0
    %195 = vmatmul.mubr.f32.gmra.mrb[0].mxu0 %v100
    %v196 = vpop.f32.mrb[0].mxu0
    %v197 = vadd.f32 0.0, %v196
    %v198 = vpop.f32.mrb[0].mxu0
    %199 = vmatprep.mubr.f32.mxu0 0.0
    %200 = vmatmul.mubr.f32.gmra.mrb[0].mxu0 %v101
    %v201 = vpop.f32.mrb[0].mxu0
    %v202 = vadd.f32 0.0, %v201
    %v203 = vpop.f32.mrb[0].mxu0
    %204 = vmatprep.mubr.f32.mxu0 0.0
    %205 = vmatmul.mubr.f32.gmra.mrb[0].mxu0 %v102
    %v206 = vpop.f32.mrb[0].mxu0
    %v207 = vadd.f32 0.0, %v206
    %v208 = vpop.f32.mrb[0].mxu0
    %209 = vdwg.mxu0
    %210 = vmatprep.subr.mxu0 0.0
    %211 = vmatpush1.msra.mxu0 %v82
    %212 = vmatprep.subr.mxu0 0.0
    %213 = vmatpush1.msra.mxu0 %v83
    %214 = vmatprep.subr.mxu0 0.0
    %215 = vmatpush1.msra.mxu0 %v84
    %216 = vmatprep.subr.mxu0 0.0
    %217 = vmatpush1.msra.mxu0 %v85
    %218 = vmatprep.subr.mxu0 0.0
    %219 = vmatpush1.msra.mxu0 %v86
    %220 = vmatprep.subr.mxu0 0.0
    %221 = vmatpush1.msra.mxu0 %v87
    %222 = vmatprep.subr.mxu0 0.0
    %223 = vmatpush1.msra.mxu0 %v88
    %224 = vmatprep.subr.mxu0 0.0
    %225 = vmatpush1.msra.mxu0 %v89
    %226 = vmatprep.subr.mxu0 0.0
    %227 = vmatpush1.msra.mxu0 %v90
    %228 = vmatprep.subr.mxu0 0.0
    %229 = vmatpush1.msra.mxu0 %v91
    %230 = vmatprep.subr.mxu0 0.0
    %231 = vmatpush1.msra.mxu0 %v92
    %232 = vmatprep.subr.mxu0 0.0
    %233 = vmatpush1.msra.mxu0 %v93
    %234 = vmatprep.subr.mxu0 0.0
    %235 = vmatpush1.msra.mxu0 %v94
    %236 = vmatprep.subr.mxu0 0.0
    %237 = vmatpush1.msra.mxu0 %v95
    %238 = vmatprep.subr.mxu0 0.0
    %239 = vmatpush1.msra.mxu0 %v96
    %240 = vmatprep.subr.mxu0 0.0
    %241 = vmatpush1.msra.mxu0 %v97
    %242 = vmatprep.subr.mxu0 0.0
    %243 = vmatpush1.msra.mxu0 0.0
    %244 = vmatprep.subr.mxu0 0.0
    %245 = vmatpush1.msra.mxu0 0.0
    %246 = vmatprep.subr.mxu0 0.0
    %247 = vmatpush1.msra.mxu0 0.0
    %248 = vmatprep.subr.mxu0 0.0
    %249 = vmatpush1.msra.mxu0 0.0
    %250 = vmatprep.subr.mxu0 0.0
    %251 = vmatpush1.msra.mxu0 0.0
    %252 = vmatprep.subr.mxu0 0.0
    %253 = vmatpush1.msra.mxu0 0.0
    %254 = vmatprep.subr.mxu0 0.0
    %255 = vmatpush1.msra.mxu0 0.0
    %256 = vmatprep.subr.mxu0 0.0
    %257 = vmatpush1.msra.mxu0 0.0
    %258 = vmatprep.subr.mxu0 0.0
    %259 = vmatpush1.msra.mxu0 0.0
    %260 = vmatprep.subr.mxu0 0.0
    %261 = vmatpush1.msra.mxu0 0.0
    %262 = vmatprep.subr.mxu0 0.0
    %263 = vmatpush1.msra.mxu0 0.0
    %264 = vmatprep.subr.mxu0 0.0
    %265 = vmatpush1.msra.mxu0 0.0
    %266 = vmatprep.subr.mxu0 0.0
    %267 = vmatpush1.msra.mxu0 0.0
    %268 = vmatprep.subr.mxu0 0.0
    %269 = vmatpush1.msra.mxu0 0.0
    %270 = vmatprep.subr.mxu0 0.0
    %271 = vmatpush1.msra.mxu0 0.0
    %272 = vmatprep.subr.mxu0 0.0
    %273 = vmatpush1.msra.mxu0 0.0
    %274 = vmatprep.mubr.f32.mxu0 0.0
    %275 = vmatmul.mubr.f32.gmra.mrb[0].mxu0 %v77
    %v276 = vpop.f32.mrb[0].mxu0
    %v277 = vadd.f32 %v187, %v276
    %v278 = vpop.f32.mrb[0].mxu0
    %279 = vmatprep.mubr.f32.mxu0 0.0
    %280 = vmatmul.mubr.f32.gmra.mrb[0].mxu0 %v78
    %v281 = vpop.f32.mrb[0].mxu0
    %v282 = vadd.f32 %v192, %v281
    %v283 = vpop.f32.mrb[0].mxu0
    %284 = vmatprep.mubr.f32.mxu0 0.0
    %285 = vmatmul.mubr.f32.gmra.mrb[0].mxu0 %v79
    %v286 = vpop.f32.mrb[0].mxu0
    %v287 = vadd.f32 %v197, %v286
    %v288 = vpop.f32.mrb[0].mxu0
    %289 = vmatprep.mubr.f32.mxu0 0.0
    %290 = vmatmul.mubr.f32.gmra.mrb[0].mxu0 %v80
    %v291 = vpop.f32.mrb[0].mxu0
    %v292 = vadd.f32 %v202, %v291
    %v293 = vpop.f32.mrb[0].mxu0
    %294 = vmatprep.mubr.f32.mxu0 0.0
    %295 = vmatmul.mubr.f32.gmra.mrb[0].mxu0 %v81
    %v296 = vpop.f32.mrb[0].mxu0
    %v297 = vadd.f32 %v207, %v296
    %v298 = vpop.f32.mrb[0].mxu0
    %299 = vdwg.mxu0
    %v300 = vld [vmem:[#allocation2 + $0x2] sm:$0xff]
    %v301 = vld [vmem:[#allocation2 + $0xa] sm:$0xff]
    %v302 = vld [vmem:[#allocation2 + $0x12] sm:$0xff]
    %v303 = vld [vmem:[#allocation2 + $0x1a] sm:$0xff]
    %v304 = vld [vmem:[#allocation2 + $0x22] sm:$0x1]
    %s305 = scalar_lea.vmem [#allocation7], 256
    %v306 = vld [vmem:[%s305] sm:$0xff]
    %v307 = vld [vmem:[%s305 + $0x8] sm:$0xff]
    %v308 = vld [vmem:[%s305 + $0x10] sm:$0xff]
    %v309 = vld [vmem:[%s305 + $0x18] sm:$0xff]
    %v310 = vld [vmem:[%s305 + $0x20] sm:$0xff]
    %v311 = vld [vmem:[%s305 + $0x28] sm:$0xff]
    %v312 = vld [vmem:[%s305 + $0x30] sm:$0xff]
    %v313 = vld [vmem:[%s305 + $0x38] sm:$0xff]
    %v314 = vld [vmem:[%s305 + $0x40] sm:$0xff]
    %v315 = vld [vmem:[%s305 + $0x48] sm:$0xff]
    %v316 = vld [vmem:[%s305 + $0x50] sm:$0xff]
    %v317 = vld [vmem:[%s305 + $0x58] sm:$0xff]
    %v318 = vld [vmem:[%s305 + $0x60] sm:$0xff]
    %v319 = vld [vmem:[%s305 + $0x68] sm:$0xff]
    %v320 = vld [vmem:[%s305 + $0x70] sm:$0xff]
    %v321 = vld [vmem:[%s305 + $0x78] sm:$0xff]
    %322 = vmatprep.subr.mxu0 0.0
    %323 = vmatpush1.msra.mxu0 %v306
    %324 = vmatprep.subr.mxu0 0.0
    %325 = vmatpush1.msra.mxu0 %v307
    %326 = vmatprep.subr.mxu0 0.0
    %327 = vmatpush1.msra.mxu0 %v308
    %328 = vmatprep.subr.mxu0 0.0
    %329 = vmatpush1.msra.mxu0 %v309
    %330 = vmatprep.subr.mxu0 0.0
    %331 = vmatpush1.msra.mxu0 %v310
    %332 = vmatprep.subr.mxu0 0.0
    %333 = vmatpush1.msra.mxu0 %v311
    %334 = vmatprep.subr.mxu0 0.0
    %335 = vmatpush1.msra.mxu0 %v312
    %336 = vmatprep.subr.mxu0 0.0
    %337 = vmatpush1.msra.mxu0 %v313
    %338 = vmatprep.subr.mxu0 0.0
    %339 = vmatpush1.msra.mxu0 %v314
    %340 = vmatprep.subr.mxu0 0.0
    %341 = vmatpush1.msra.mxu0 %v315
    %342 = vmatprep.subr.mxu0 0.0
    %343 = vmatpush1.msra.mxu0 %v316
    %344 = vmatprep.subr.mxu0 0.0
    %345 = vmatpush1.msra.mxu0 %v317
    %346 = vmatprep.subr.mxu0 0.0
    %347 = vmatpush1.msra.mxu0 %v318
    %348 = vmatprep.subr.mxu0 0.0
    %349 = vmatpush1.msra.mxu0 %v319
    %350 = vmatprep.subr.mxu0 0.0
    %351 = vmatpush1.msra.mxu0 %v320
    %352 = vmatprep.subr.mxu0 0.0
    %353 = vmatpush1.msra.mxu0 %v321
    %354 = vmatprep.subr.mxu0 0.0
    %355 = vmatpush1.msra.mxu0 0.0
    %356 = vmatprep.subr.mxu0 0.0
    %357 = vmatpush1.msra.mxu0 0.0
    %358 = vmatprep.subr.mxu0 0.0
    %359 = vmatpush1.msra.mxu0 0.0
    %360 = vmatprep.subr.mxu0 0.0
    %361 = vmatpush1.msra.mxu0 0.0
    %362 = vmatprep.subr.mxu0 0.0
    %363 = vmatpush1.msra.mxu0 0.0
    %364 = vmatprep.subr.mxu0 0.0
    %365 = vmatpush1.msra.mxu0 0.0
    %366 = vmatprep.subr.mxu0 0.0
    %367 = vmatpush1.msra.mxu0 0.0
    %368 = vmatprep.subr.mxu0 0.0
    %369 = vmatpush1.msra.mxu0 0.0
    %370 = vmatprep.subr.mxu0 0.0
    %371 = vmatpush1.msra.mxu0 0.0
    %372 = vmatprep.subr.mxu0 0.0
    %373 = vmatpush1.msra.mxu0 0.0
    %374 = vmatprep.subr.mxu0 0.0
    %375 = vmatpush1.msra.mxu0 0.0
    %376 = vmatprep.subr.mxu0 0.0
    %377 = vmatpush1.msra.mxu0 0.0
    %378 = vmatprep.subr.mxu0 0.0
    %379 = vmatpush1.msra.mxu0 0.0
    %380 = vmatprep.subr.mxu0 0.0
    %381 = vmatpush1.msra.mxu0 0.0
    %382 = vmatprep.subr.mxu0 0.0
    %383 = vmatpush1.msra.mxu0 0.0
    %384 = vmatprep.subr.mxu0 0.0
    %385 = vmatpush1.msra.mxu0 0.0
    %386 = vmatprep.mubr.f32.mxu0 0.0
    %387 = vmatmul.mubr.f32.gmra.mrb[0].mxu0 %v300
    %v388 = vpop.f32.mrb[0].mxu0
    %v389 = vadd.f32 0.0, %v388
    %v390 = vpop.f32.mrb[0].mxu0
    %391 = vmatprep.mubr.f32.mxu0 0.0
    %392 = vmatmul.mubr.f32.gmra.mrb[0].mxu0 %v301
    %v393 = vpop.f32.mrb[0].mxu0
    %v394 = vadd.f32 0.0, %v393
    %v395 = vpop.f32.mrb[0].mxu0
    %396 = vmatprep.mubr.f32.mxu0 0.0
    %397 = vmatmul.mubr.f32.gmra.mrb[0].mxu0 %v302
    %v398 = vpop.f32.mrb[0].mxu0
    %v399 = vadd.f32 0.0, %v398
    %v400 = vpop.f32.mrb[0].mxu0
    %401 = vmatprep.mubr.f32.mxu0 0.0
    %402 = vmatmul.mubr.f32.gmra.mrb[0].mxu0 %v303
    %v403 = vpop.f32.mrb[0].mxu0
    %v404 = vadd.f32 0.0, %v403
    %v405 = vpop.f32.mrb[0].mxu0
    %406 = vmatprep.mubr.f32.mxu0 0.0
    %407 = vmatmul.mubr.f32.gmra.mrb[0].mxu0 %v304
    %v408 = vpop.f32.mrb[0].mxu0
    %v409 = vadd.f32 0.0, %v408
    %v410 = vpop.f32.mrb[0].mxu0
    %411 = vdwg.mxu0
    %v412 = vadd.f32 %v277, %v389
    %v413 = vadd.f32 %v282, %v394
    %v414 = vadd.f32 %v287, %v399
    %v415 = vadd.f32 %v292, %v404
    %v416 = vadd.f32 %v297, %v409
    %v417 = vld [vmem:[%s2] sm:$0x1]
    %v419 = vlaneseq
    %v420 = vshrl.u32 %v419, 7
    %v421 = vsub.s32 0, %v420
    %v422 = vrot.slane %v417, %v421
    %v424 = vadd.f32 %v412, %v422
    %v425 = vadd.f32 %v413, %v422
    %v426 = vadd.f32 %v414, %v422
    %v427 = vadd.f32 %v415, %v422
    %v428 = vadd.f32 %v416, %v422
    %v429 = vmax.f32 %v424, 0.0
    %v430 = vmax.f32 %v425, 0.0
    %v431 = vmax.f32 %v426, 0.0
    %v432 = vmax.f32 %v427, 0.0
    %v433 = vmax.f32 %v428, 0.0
    %434 = vst [vmem:[#allocation3 + $0x1] sm:$0xff] %v429
    %435 = vst [vmem:[#allocation3 + $0x9] sm:$0xff] %v430
    %436 = vst [vmem:[#allocation3 + $0x11] sm:$0xfe] %v431
    %437 = vst [vmem:[#allocation3 + $0x19] sm:$0xff] %v432
    %438 = vst [vmem:[#allocation3 + $0x21] sm:$0x1] %v433
    %s439 = scalar_lea.vmem [#allocation9], 128
    %v440 = vld [vmem:[%s439] sm:$0xff]
    %v441 = vld [vmem:[%s439 + $0x8] sm:$0xff]
    %v442 = vld [vmem:[%s439 + $0x10] sm:$0xff]
    %v443 = vld [vmem:[%s439 + $0x18] sm:$0xff]
    %v444 = vld [vmem:[%s439 + $0x20] sm:$0xff]
    %v445 = vld [vmem:[%s439 + $0x28] sm:$0xff]
    %v446 = vld [vmem:[%s439 + $0x30] sm:$0xff]
    %v447 = vld [vmem:[%s439 + $0x38] sm:$0xff]
    %v448 = vld [vmem:[%s439 + $0x40] sm:$0xff]
    %v449 = vld [vmem:[%s439 + $0x48] sm:$0xff]
    %v450 = vld [vmem:[%s439 + $0x50] sm:$0xff]
    %v451 = vld [vmem:[%s439 + $0x58] sm:$0xff]
    %v452 = vld [vmem:[%s439 + $0x60] sm:$0xff]
    %v453 = vld [vmem:[%s439 + $0x68] sm:$0xff]
    %v454 = vld [vmem:[%s439 + $0x70] sm:$0xff]
    %v455 = vld [vmem:[%s439 + $0x78] sm:$0xff]
    %v456 = vld [vmem:[#allocation3] sm:$0xff]
    %v457 = vld [vmem:[#allocation3 + $0x8] sm:$0xff]
    %v458 = vld [vmem:[#allocation3 + $0x10] sm:$0xff]
    %v459 = vld [vmem:[#allocation3 + $0x18] sm:$0xff]
    %v460 = vld [vmem:[#allocation3 + $0x20] sm:$0x1]
    %v461 = vld [vmem:[#allocation9] sm:$0xff]
    %v462 = vld [vmem:[#allocation9 + $0x8] sm:$0xff]
    %v463 = vld [vmem:[#allocation9 + $0x10] sm:$0xff]
    %v464 = vld [vmem:[#allocation9 + $0x18] sm:$0xff]
    %v465 = vld [vmem:[#allocation9 + $0x20] sm:$0xff]
    %v466 = vld [vmem:[#allocation9 + $0x28] sm:$0xff]
    %v467 = vld [vmem:[#allocation9 + $0x30] sm:$0xff]
    %v468 = vld [vmem:[#allocation9 + $0x38] sm:$0xff]
    %v469 = vld [vmem:[#allocation9 + $0x40] sm:$0xff]
    %v470 = vld [vmem:[#allocation9 + $0x48] sm:$0xff]
    %v471 = vld [vmem:[#allocation9 + $0x50] sm:$0xff]
    %v472 = vld [vmem:[#allocation9 + $0x58] sm:$0xff]
    %v473 = vld [vmem:[#allocation9 + $0x60] sm:$0xff]
    %v474 = vld [vmem:[#allocation9 + $0x68] sm:$0xff]
    %v475 = vld [vmem:[#allocation9 + $0x70] sm:$0xff]
    %v476 = vld [vmem:[#allocation9 + $0x78] sm:$0xff]
    %477 = vmatprep.subr.mxu0 0.0
    %478 = vmatpush1.msra.mxu0 %v461
    %479 = vmatprep.subr.mxu0 0.0
    %480 = vmatpush1.msra.mxu0 %v462
    %481 = vmatprep.subr.mxu0 0.0
    %482 = vmatpush1.msra.mxu0 %v463
    %483 = vmatprep.subr.mxu0 0.0
    %484 = vmatpush1.msra.mxu0 %v464
    %485 = vmatprep.subr.mxu0 0.0
    %486 = vmatpush1.msra.mxu0 %v465
    %487 = vmatprep.subr.mxu0 0.0
    %488 = vmatpush1.msra.mxu0 %v466
    %489 = vmatprep.subr.mxu0 0.0
    %490 = vmatpush1.msra.mxu0 %v467
    %491 = vmatprep.subr.mxu0 0.0
    %492 = vmatpush1.msra.mxu0 %v468
    %493 = vmatprep.subr.mxu0 0.0
    %494 = vmatpush1.msra.mxu0 %v469
    %495 = vmatprep.subr.mxu0 0.0
    %496 = vmatpush1.msra.mxu0 %v470
    %497 = vmatprep.subr.mxu0 0.0
    %498 = vmatpush1.msra.mxu0 %v471
    %499 = vmatprep.subr.mxu0 0.0
    %500 = vmatpush1.msra.mxu0 %v472
    %501 = vmatprep.subr.mxu0 0.0
    %502 = vmatpush1.msra.mxu0 %v473
    %503 = vmatprep.subr.mxu0 0.0
    %504 = vmatpush1.msra.mxu0 %v474
    %505 = vmatprep.subr.mxu0 0.0
    %506 = vmatpush1.msra.mxu0 %v475
    %507 = vmatprep.subr.mxu0 0.0
    %508 = vmatpush1.msra.mxu0 %v476
    %509 = vmatprep.subr.mxu0 0.0
    %510 = vmatpush1.msra.mxu0 0.0
    %511 = vmatprep.subr.mxu0 0.0
    %512 = vmatpush1.msra.mxu0 0.0
    %513 = vmatprep.subr.mxu0 0.0
    %514 = vmatpush1.msra.mxu0 0.0
    %515 = vmatprep.subr.mxu0 0.0
    %516 = vmatpush1.msra.mxu0 0.0
    %517 = vmatprep.subr.mxu0 0.0
    %518 = vmatpush1.msra.mxu0 0.0
    %519 = vmatprep.subr.mxu0 0.0
    %520 = vmatpush1.msra.mxu0 0.0
    %521 = vmatprep.subr.mxu0 0.0
    %522 = vmatpush1.msra.mxu0 0.0
    %523 = vmatprep.subr.mxu0 0.0
    %524 = vmatpush1.msra.mxu0 0.0
    %525 = vmatprep.subr.mxu0 0.0
    %526 = vmatpush1.msra.mxu0 0.0
    %527 = vmatprep.subr.mxu0 0.0
    %528 = vmatpush1.msra.mxu0 0.0
    %529 = vmatprep.subr.mxu0 0.0
    %530 = vmatpush1.msra.mxu0 0.0
    %531 = vmatprep.subr.mxu0 0.0
    %532 = vmatpush1.msra.mxu0 0.0
    %533 = vmatprep.subr.mxu0 0.0
    %534 = vmatpush1.msra.mxu0 0.0
    %535 = vmatprep.subr.mxu0 0.0
    %536 = vmatpush1.msra.mxu0 0.0
    %537 = vmatprep.subr.mxu0 0.0
    %538 = vmatpush1.msra.mxu0 0.0
    %539 = vmatprep.subr.mxu0 0.0
    %540 = vmatpush1.msra.mxu0 0.0
    %541 = vmatprep.mubr.f32.mxu0 0.0
    %542 = vmatmul.mubr.f32.gmra.mrb[0].mxu0 %v456
    %v543 = vpop.f32.mrb[0].mxu0
    %v544 = vadd.f32 0.0, %v543
    %v545 = vpop.f32.mrb[0].mxu0
    %546 = vmatprep.mubr.f32.mxu0 0.0
    %547 = vmatmul.mubr.f32.gmra.mrb[0].mxu0 %v457
    %v548 = vpop.f32.mrb[0].mxu0
    %v549 = vadd.f32 0.0, %v548
    %v550 = vpop.f32.mrb[0].mxu0
    %551 = vmatprep.mubr.f32.mxu0 0.0
    %552 = vmatmul.mubr.f32.gmra.mrb[0].mxu0 %v458
    %v553 = vpop.f32.mrb[0].mxu0
    %v554 = vadd.f32 0.0, %v553
    %v555 = vpop.f32.mrb[0].mxu0
    %556 = vmatprep.mubr.f32.mxu0 0.0
    %557 = vmatmul.mubr.f32.gmra.mrb[0].mxu0 %v459
    %v558 = vpop.f32.mrb[0].mxu0
    %v559 = vadd.f32 0.0, %v558
    %v560 = vpop.f32.mrb[0].mxu0
    %561 = vmatprep.mubr.f32.mxu0 0.0
    %562 = vmatmul.mubr.f32.gmra.mrb[0].mxu0 %v460
    %v563 = vpop.f32.mrb[0].mxu0
    %v564 = vadd.f32 0.0, %v563
    %v565 = vpop.f32.mrb[0].mxu0
    %566 = vdwg.mxu0
    %567 = vmatprep.subr.mxu0 0.0
    %568 = vmatpush1.msra.mxu0 %v440
    %569 = vmatprep.subr.mxu0 0.0
    %570 = vmatpush1.msra.mxu0 %v441
    %571 = vmatprep.subr.mxu0 0.0
    %572 = vmatpush1.msra.mxu0 %v442
    %573 = vmatprep.subr.mxu0 0.0
    %574 = vmatpush1.msra.mxu0 %v443
    %575 = vmatprep.subr.mxu0 0.0
    %576 = vmatpush1.msra.mxu0 %v444
    %577 = vmatprep.subr.mxu0 0.0
    %578 = vmatpush1.msra.mxu0 %v445
    %579 = vmatprep.subr.mxu0 0.0
    %580 = vmatpush1.msra.mxu0 %v446
    %581 = vmatprep.subr.mxu0 0.0
    %582 = vmatpush1.msra.mxu0 %v447
    %583 = vmatprep.subr.mxu0 0.0
    %584 = vmatpush1.msra.mxu0 %v448
    %585 = vmatprep.subr.mxu0 0.0
    %586 = vmatpush1.msra.mxu0 %v449
    %587 = vmatprep.subr.mxu0 0.0
    %588 = vmatpush1.msra.mxu0 %v450
    %589 = vmatprep.subr.mxu0 0.0
    %590 = vmatpush1.msra.mxu0 %v451
    %591 = vmatprep.subr.mxu0 0.0
    %592 = vmatpush1.msra.mxu0 %v452
    %593 = vmatprep.subr.mxu0 0.0
    %594 = vmatpush1.msra.mxu0 %v453
    %595 = vmatprep.subr.mxu0 0.0
    %596 = vmatpush1.msra.mxu0 %v454
    %597 = vmatprep.subr.mxu0 0.0
    %598 = vmatpush1.msra.mxu0 %v455
    %599 = vmatprep.subr.mxu0 0.0
    %600 = vmatpush1.msra.mxu0 0.0
    %601 = vmatprep.subr.mxu0 0.0
    %602 = vmatpush1.msra.mxu0 0.0
    %603 = vmatprep.subr.mxu0 0.0
    %604 = vmatpush1.msra.mxu0 0.0
    %605 = vmatprep.subr.mxu0 0.0
    %606 = vmatpush1.msra.mxu0 0.0
    %607 = vmatprep.subr.mxu0 0.0
    %608 = vmatpush1.msra.mxu0 0.0
    %609 = vmatprep.subr.mxu0 0.0
    %610 = vmatpush1.msra.mxu0 0.0
    %611 = vmatprep.subr.mxu0 0.0
    %612 = vmatpush1.msra.mxu0 0.0
    %613 = vmatprep.subr.mxu0 0.0
    %614 = vmatpush1.msra.mxu0 0.0
    %615 = vmatprep.subr.mxu0 0.0
    %616 = vmatpush1.msra.mxu0 0.0
    %617 = vmatprep.subr.mxu0 0.0
    %618 = vmatpush1.msra.mxu0 0.0
    %619 = vmatprep.subr.mxu0 0.0
    %620 = vmatpush1.msra.mxu0 0.0
    %621 = vmatprep.subr.mxu0 0.0
    %622 = vmatpush1.msra.mxu0 0.0
    %623 = vmatprep.subr.mxu0 0.0
    %624 = vmatpush1.msra.mxu0 0.0
    %625 = vmatprep.subr.mxu0 0.0
    %626 = vmatpush1.msra.mxu0 0.0
    %627 = vmatprep.subr.mxu0 0.0
    %628 = vmatpush1.msra.mxu0 0.0
    %629 = vmatprep.subr.mxu0 0.0
    %630 = vmatpush1.msra.mxu0 0.0
    %631 = vmatprep.mubr.f32.mxu0 0.0
    %632 = vmatmul.mubr.f32.gmra.mrb[0].mxu0 %v429
    %v633 = vpop.f32.mrb[0].mxu0
    %v634 = vadd.f32 %v544, %v633
    %v635 = vpop.f32.mrb[0].mxu0
    %636 = vmatprep.mubr.f32.mxu0 0.0
    %637 = vmatmul.mubr.f32.gmra.mrb[0].mxu0 %v430
    %v638 = vpop.f32.mrb[0].mxu0
    %v639 = vadd.f32 %v549, %v638
    %v640 = vpop.f32.mrb[0].mxu0
    %641 = vmatprep.mubr.f32.mxu0 0.0
    %642 = vmatmul.mubr.f32.gmra.mrb[0].mxu0 %v431
    %v643 = vpop.f32.mrb[0].mxu0
    %v644 = vadd.f32 %v554, %v643
    %v645 = vpop.f32.mrb[0].mxu0
    %646 = vmatprep.mubr.f32.mxu0 0.0
    %647 = vmatmul.mubr.f32.gmra.mrb[0].mxu0 %v432
    %v648 = vpop.f32.mrb[0].mxu0
    %v649 = vadd.f32 %v559, %v648
    %v650 = vpop.f32.mrb[0].mxu0
    %651 = vmatprep.mubr.f32.mxu0 0.0
    %652 = vmatmul.mubr.f32.gmra.mrb[0].mxu0 %v433
    %v653 = vpop.f32.mrb[0].mxu0
    %v654 = vadd.f32 %v564, %v653
    %v655 = vpop.f32.mrb[0].mxu0
    %656 = vdwg.mxu0
    %v657 = vld [vmem:[#allocation3 + $0x2] sm:$0xff]
    %v658 = vld [vmem:[#allocation3 + $0xa] sm:$0xff]
    %v659 = vld [vmem:[#allocation3 + $0x12] sm:$0xff]
    %v660 = vld [vmem:[#allocation3 + $0x1a] sm:$0xff]
    %v661 = vld [vmem:[#allocation3 + $0x22] sm:$0x1]
    %s662 = scalar_lea.vmem [#allocation9], 256
    %v663 = vld [vmem:[%s662] sm:$0xff]
    %v664 = vld [vmem:[%s662 + $0x8] sm:$0xff]
    %v665 = vld [vmem:[%s662 + $0x10] sm:$0xff]
    %v666 = vld [vmem:[%s662 + $0x18] sm:$0xff]
    %v667 = vld [vmem:[%s662 + $0x20] sm:$0xff]
    %v668 = vld [vmem:[%s662 + $0x28] sm:$0xff]
    %v669 = vld [vmem:[%s662 + $0x30] sm:$0xff]
    %v670 = vld [vmem:[%s662 + $0x38] sm:$0xff]
    %v671 = vld [vmem:[%s662 + $0x40] sm:$0xff]
    %v672 = vld [vmem:[%s662 + $0x48] sm:$0xff]
    %v673 = vld [vmem:[%s662 + $0x50] sm:$0xff]
    %v674 = vld [vmem:[%s662 + $0x58] sm:$0xff]
    %v675 = vld [vmem:[%s662 + $0x60] sm:$0xff]
    %v676 = vld [vmem:[%s662 + $0x68] sm:$0xff]
    %v677 = vld [vmem:[%s662 + $0x70] sm:$0xff]
    %v678 = vld [vmem:[%s662 + $0x78] sm:$0xff]
    %679 = vmatprep.subr.mxu0 0.0
    %680 = vmatpush1.msra.mxu0 %v663
    %681 = vmatprep.subr.mxu0 0.0
    %682 = vmatpush1.msra.mxu0 %v664
    %683 = vmatprep.subr.mxu0 0.0
    %684 = vmatpush1.msra.mxu0 %v665
    %685 = vmatprep.subr.mxu0 0.0
    %686 = vmatpush1.msra.mxu0 %v666
    %687 = vmatprep.subr.mxu0 0.0
    %688 = vmatpush1.msra.mxu0 %v667
    %689 = vmatprep.subr.mxu0 0.0
    %690 = vmatpush1.msra.mxu0 %v668
    %691 = vmatprep.subr.mxu0 0.0
    %692 = vmatpush1.msra.mxu0 %v669
    %693 = vmatprep.subr.mxu0 0.0
    %694 = vmatpush1.msra.mxu0 %v670
    %695 = vmatprep.subr.mxu0 0.0
    %696 = vmatpush1.msra.mxu0 %v671
    %697 = vmatprep.subr.mxu0 0.0
    %698 = vmatpush1.msra.mxu0 %v672
    %699 = vmatprep.subr.mxu0 0.0
    %700 = vmatpush1.msra.mxu0 %v673
    %701 = vmatprep.subr.mxu0 0.0
    %702 = vmatpush1.msra.mxu0 %v674
    %703 = vmatprep.subr.mxu0 0.0
    %704 = vmatpush1.msra.mxu0 %v675
    %705 = vmatprep.subr.mxu0 0.0
    %706 = vmatpush1.msra.mxu0 %v676
    %707 = vmatprep.subr.mxu0 0.0
    %708 = vmatpush1.msra.mxu0 %v677
    %709 = vmatprep.subr.mxu0 0.0
    %710 = vmatpush1.msra.mxu0 %v678
    %711 = vmatprep.subr.mxu0 0.0
    %712 = vmatpush1.msra.mxu0 0.0
    %713 = vmatprep.subr.mxu0 0.0
    %714 = vmatpush1.msra.mxu0 0.0
    %715 = vmatprep.subr.mxu0 0.0
    %716 = vmatpush1.msra.mxu0 0.0
    %717 = vmatprep.subr.mxu0 0.0
    %718 = vmatpush1.msra.mxu0 0.0
    %719 = vmatprep.subr.mxu0 0.0
    %720 = vmatpush1.msra.mxu0 0.0
    %721 = vmatprep.subr.mxu0 0.0
    %722 = vmatpush1.msra.mxu0 0.0
    %723 = vmatprep.subr.mxu0 0.0
    %724 = vmatpush1.msra.mxu0 0.0
    %725 = vmatprep.subr.mxu0 0.0
    %726 = vmatpush1.msra.mxu0 0.0
    %727 = vmatprep.subr.mxu0 0.0
    %728 = vmatpush1.msra.mxu0 0.0
    %729 = vmatprep.subr.mxu0 0.0
    %730 = vmatpush1.msra.mxu0 0.0
    %731 = vmatprep.subr.mxu0 0.0
    %732 = vmatpush1.msra.mxu0 0.0
    %733 = vmatprep.subr.mxu0 0.0
    %734 = vmatpush1.msra.mxu0 0.0
    %735 = vmatprep.subr.mxu0 0.0
    %736 = vmatpush1.msra.mxu0 0.0
    %737 = vmatprep.subr.mxu0 0.0
    %738 = vmatpush1.msra.mxu0 0.0
    %739 = vmatprep.subr.mxu0 0.0
    %740 = vmatpush1.msra.mxu0 0.0
    %741 = vmatprep.subr.mxu0 0.0
    %742 = vmatpush1.msra.mxu0 0.0
    %743 = vmatprep.mubr.f32.mxu0 0.0
    %744 = vmatmul.mubr.f32.gmra.mrb[0].mxu0 %v657
    %v745 = vpop.f32.mrb[0].mxu0
    %v746 = vadd.f32 0.0, %v745
    %v747 = vpop.f32.mrb[0].mxu0
    %748 = vmatprep.mubr.f32.mxu0 0.0
    %749 = vmatmul.mubr.f32.gmra.mrb[0].mxu0 %v658
    %v750 = vpop.f32.mrb[0].mxu0
    %v751 = vadd.f32 0.0, %v750
    %v752 = vpop.f32.mrb[0].mxu0
    %753 = vmatprep.mubr.f32.mxu0 0.0
    %754 = vmatmul.mubr.f32.gmra.mrb[0].mxu0 %v659
    %v755 = vpop.f32.mrb[0].mxu0
    %v756 = vadd.f32 0.0, %v755
    %v757 = vpop.f32.mrb[0].mxu0
    %758 = vmatprep.mubr.f32.mxu0 0.0
    %759 = vmatmul.mubr.f32.gmra.mrb[0].mxu0 %v660
    %v760 = vpop.f32.mrb[0].mxu0
    %v761 = vadd.f32 0.0, %v760
    %v762 = vpop.f32.mrb[0].mxu0
    %763 = vmatprep.mubr.f32.mxu0 0.0
    %764 = vmatmul.mubr.f32.gmra.mrb[0].mxu0 %v661
    %v765 = vpop.f32.mrb[0].mxu0
    %v766 = vadd.f32 0.0, %v765
    %v767 = vpop.f32.mrb[0].mxu0
    %768 = vdwg.mxu0
    %v769 = vadd.f32 %v634, %v746
    %v770 = vadd.f32 %v639, %v751
    %v771 = vadd.f32 %v644, %v756
    %v772 = vadd.f32 %v649, %v761
    %v773 = vadd.f32 %v654, %v766
    %v774 = vld [vmem:[%s4] sm:$0x1]
    %v776 = vlaneseq
    %v777 = vshrl.u32 %v776, 7
    %v778 = vsub.s32 0, %v777
    %v779 = vrot.slane %v774, %v778
    %v781 = vadd.f32 %v769, %v779
    %v782 = vadd.f32 %v770, %v779
    %v783 = vadd.f32 %v771, %v779
    %v784 = vadd.f32 %v772, %v779
    %v785 = vadd.f32 %v773, %v779
    %v786 = vld [vmem:[#allocation4] sm:$0xff]
    %v787 = vld [vmem:[#allocation4 + $0x8] sm:$0xff]
    %v788 = vadd.f32 %v781, %v786
    %v789 = vadd.f32 %v782, %v787
    %790 = vst [vmem:[#allocation10] sm:$0xff] %v788
    %791 = vst [vmem:[#allocation10 + $0x8] sm:$0xff] %v789
    %v792 = vld [vmem:[%s70] sm:$0xff]
    %v793 = vld [vmem:[%s70 + $0x8] sm:$0xff]
    %vm796 = vcmask 1040384
    %v797 = vrot.slane %v792, 7
    %v798 = vrot.slane %v793, 7
    %v799 = vsel %vm796, %v797, %v798
    %v803 = vadd.f32 %v783, %v797
    %v804 = vadd.f32 %v784, %v799
    %v805 = vadd.f32 %v785, %v798
    %s806 = scalar_lea.vmem [#allocation10], 16
    %807 = vst [vmem:[%s806 - $0x1] sm:$0xfe] %v803
    %808 = vst [vmem:[%s806 + $0x7] sm:$0xff] %v804
    %809 = vst [vmem:[%s806 + $0xf] sm:$0x1] %v805
    // Predicated region
    $region34: #{tpu_custom_call.1} parent=1 // pred_check
      _
    $region35: #{tpu_custom_call.1} parent=1 // pred_check_branch
      %811 = sbr.rel (0) target = $region37
    $region36: #{tpu_custom_call.1} parent=1 // pred_region
      %s813 = ssub.s32 512, 512
      %814 = vsyncadd [#allocation6], %s813
      %s815 = sshll.u32 [#allocation10], 4
      %s816 = int_to_ptr.vmem [resolvable:$true] %s815
      %821 = dma.vmem_to_hbm [thread:$0]  %s816, 512, %s5, [#allocation6], 128, 128, 8
    $region37: #{tpu_custom_call.1} parent=1 // pred_fallthru
      _
    // Predicated region
    $region38: #{tpu_custom_call.1} parent=1 // pred_check
      _
    $region39: #{tpu_custom_call.1} parent=1 // pred_check_branch
      %823 = sbr.rel (0) target = $region41
    $region40: #{tpu_custom_call.1} parent=1 // pred_region
      %824 = dma.done [#allocation6], 512
    $region41: #{tpu_custom_call.1} parent=1 // pred_fallthru
      _
    %825 = vsyncpa [#allocation5], 1
    %826 = vsyncpa [#allocation8], 1
    %827 = vsyncpa [#allocation6], 1

</llo_original>
